<compile_context>
chip_gen: v7x
topology: tpu7x:2x2x1
jax: 0.10.0
libtpu: 0.0.40
codegen_flags: <defaults>
</compile_context>

<pallas_src>
import functools

import jax
import jax.numpy as jnp
from jax.experimental import pallas as pl
from jax.experimental.pallas import tpu as pltpu


def _round_up(x, m):
    return ((x + m - 1) // m) * m


def _self_attention_kernel(qT_ref, kv_ref, xres_ref, gamma_ref, o_ref,
                           *, c, cq_pad, c_ext, compute_dtype):
    """One (batch, query-tile) step.

    qT_ref   : (1, TQ, Cq_pad)         query tile, already transposed, compute dtype
    kv_ref   : (1, Cq_pad + C_ext, N)  per-image K rows then V_ext rows (row C of the
                                        V_ext block is all ones -> softmax denominator)
    xres_ref : (1, C, TQ)              residual input tile
    gamma_ref: (1, 1) SMEM             learned residual gate
    o_ref    : (1, C, TQ)              output tile (lane-dense store)
    """
    qT = qT_ref[0]                                    # (TQ, Cq_pad)
    k_blk = kv_ref[0, 0:cq_pad, :]                    # (Cq_pad, N)
    v_blk = kv_ref[0, cq_pad:cq_pad + c_ext, :]       # (C_ext, N)

    # scores s[i, j] = sum_c q[c, i] * k[c, j]  (plain NN matmul, f32 accumulation).
    s = jnp.dot(qT, k_blk, preferred_element_type=jnp.float32)       # (TQ, N)
    s = s - jnp.max(s, axis=-1, keepdims=True)

    # Unnormalized probabilities. exp runs in the compute dtype (bf16 EUP on v6e/v7x);
    # the shared exp(-max) factor cancels in the deferred normalization below.
    p = jnp.exp(s.astype(compute_dtype))                             # (TQ, N)

    # out_ext[c, i] = sum_j v_ext[c, j] * p[i, j]  (NT dot_general, contraction on lanes).
    # Row `c` of v_ext is all ones, so row `c` of out_ext is the per-query denominator.
    out = jax.lax.dot_general(v_blk, p, (((1,), (1,)), ((), ())),
                              preferred_element_type=jnp.float32)    # (C_ext, TQ)

    # Deferred softmax normalization fused into the gamma/residual epilogue:
    # a (C, TQ) scale instead of a (TQ, N) one.
    inv_l = pl.reciprocal(out[c:c + 1, :], approx=True)              # (1, TQ)
    scale = gamma_ref[0, 0] * inv_l                                  # (1, TQ)
    o_ref[0] = (out[0:c, :] * scale
                + xres_ref[0].astype(jnp.float32)).astype(o_ref.dtype)


def _vmem_budget_bytes():
    """~82% of the chip's physical VMEM (headroom for Mosaic internal scratch)."""
    try:
        cap = int(pltpu.get_tpu_info().vmem_capacity_bytes)  # 128 MiB v5e/v6e, 64 MiB v7x
    except Exception:
        cap = 64 * 2 ** 20                                   # conservative fallback
    return int(cap * 0.82)


def _footprint_bytes(tq, n, c, cq_pad, c_ext, it_c, it_x):
    """Rough per-step VMEM footprint at tile size `tq` (double-buffered inputs/outputs)."""
    kv = 2 * (cq_pad + c_ext) * n * it_c       # per-image K/V_ext slab
    qt = 2 * tq * cq_pad * it_c                # query tile
    res = 2 * c * tq * it_x                    # residual tile
    outb = 2 * c * tq * it_x                   # output tile
    s = tq * n * 4                             # f32 scores
    p = tq * n * it_c                          # probabilities
    acc = c_ext * tq * 4                       # f32 output accumulator
    return kv + qt + res + outb + s + p + acc


def self_attention(x_nchw, wq, bq, wk, bk, wv, bv, gamma, *, tq=512, compute_dtype=None):
    """SAGAN self-attention forward (matches the PyTorch module exactly).

    x_nchw: (B, C, H, W). wq/wk: (C//8, C), wv: (C, C), 1-D biases, gamma: (1,).
    compute_dtype: MXU operand dtype (None -> x dtype). Matmul accumulation and softmax
    statistics stay in float32; bf16 also uses the bf16 exp path (best on v6e/v7x).
    """
    B, C, H, W = x_nchw.shape
    N = H * W
    Cq = wq.shape[0]
    assert Cq == C // 8 and Cq >= 1, (
        "query/key conv must have C//8 >= 1 output channels (requires in_channels >= 8)")
    assert wq.shape == (Cq, C) and wk.shape == (Cq, C) and wv.shape == (C, C)

    cdt = jnp.dtype(compute_dtype) if compute_dtype is not None else jnp.dtype(x_nchw.dtype)
    it_c = cdt.itemsize
    it_x = jnp.dtype(x_nchw.dtype).itemsize

    x = x_nchw.reshape(B, C, N)                      # free reshape, no HBM transpose
    x_c = x.astype(cdt)

    # Sublane-aligned channel paddings; padded rows are zero and contribute nothing.
    cq_pad = _round_up(Cq, 8)
    c_ext = _round_up(C + 1, 8)                      # V rows + 1 all-ones row (+ zero pad)

    f32 = jnp.float32
    # Fused K / V_ext projection weights; the all-ones row comes from a zero weight row
    # with bias 1, so the softmax denominator costs one extra MXU output row.
    w_kv = jnp.zeros((cq_pad + c_ext, C), f32)
    w_kv = w_kv.at[0:Cq].set(wk.astype(f32))
    w_kv = w_kv.at[cq_pad:cq_pad + C].set(wv.astype(f32))
    b_kv = jnp.zeros((cq_pad + c_ext,), f32)
    b_kv = b_kv.at[0:Cq].set(bk.astype(f32))
    b_kv = b_kv.at[cq_pad:cq_pad + C].set(bv.astype(f32))
    b_kv = b_kv.at[cq_pad + C].set(1.0)              # deferred-softmax denominator row

    wq_p = jnp.zeros((cq_pad, C), f32).at[0:Cq].set(wq.astype(f32))
    bq_p = jnp.zeros((cq_pad,), f32).at[0:Cq].set(bq.astype(f32))

    # Projections hoisted out of the kernel: f32 accumulation, one cast to the compute
    # dtype (bf16 slab halves VMEM / vld traffic and removes per-tile casts). Q comes
    # out already transposed so the kernel needs no in-kernel transpose.
    kv = (jnp.einsum('oc,bcn->bon', w_kv.astype(cdt), x_c,
                     preferred_element_type=f32)
          + b_kv[None, :, None]).astype(cdt)         # (B, Cq_pad + C_ext, N)
    qT = (jnp.einsum('oc,bcn->bno', wq_p.astype(cdt), x_c,
                     preferred_element_type=f32)
          + bq_p[None, None, :]).astype(cdt)         # (B, N, Cq_pad)

    gamma2 = gamma.reshape(1, 1).astype(f32)

    # Query-tile size: largest 128-multiple divisor of N (<= tq) whose footprint fits the
    # chip's VMEM budget; otherwise run the whole image untiled.
    budget = _vmem_budget_bytes()
    cands = [d for d in range(128, min(tq, N) + 1, 128) if N % d == 0]
    if cands:
        fitting = [d for d in cands
                   if _footprint_bytes(d, N, C, cq_pad, c_ext, it_c, it_x) <= budget]
        tq = max(fitting) if fitting else min(cands)
    else:
        tq = N
    # TODO(synk): add a flash-style online-softmax K/V-tiled fallback for configs whose
    # per-image K/V slab + (TQ, N) score tile exceed VMEM even at TQ=128 (huge C,N on v7x).

    fp = _footprint_bytes(tq, N, C, cq_pad, c_ext, it_c, it_x)
    vmem_limit = int(min(budget, max(32 * 2 ** 20, int(1.3 * fp))))

    kernel = functools.partial(_self_attention_kernel,
                               c=C, cq_pad=cq_pad, c_ext=c_ext, compute_dtype=cdt)

    out = pl.pallas_call(
        kernel,
        out_shape=jax.ShapeDtypeStruct((B, C, N), x.dtype),
        grid=(B, N // tq),
        in_specs=[
            pl.BlockSpec((1, tq, cq_pad), lambda b, q: (b, q, 0)),         # qT tile
            pl.BlockSpec((1, cq_pad + c_ext, N), lambda b, q: (b, 0, 0)),  # per-image K/V_ext
            pl.BlockSpec((1, C, tq), lambda b, q: (b, 0, q)),              # residual x tile
            pl.BlockSpec((1, 1), lambda b, q: (0, 0),
                         memory_space=pltpu.SMEM),                         # gamma
        ],
        out_specs=pl.BlockSpec((1, C, tq), lambda b, q: (b, 0, q)),
        compiler_params=pltpu.CompilerParams(
            dimension_semantics=("parallel", "parallel"),
            vmem_limit_bytes=vmem_limit),
    )(qT, kv, x, gamma2)

    return out.reshape(B, C, H, W)


def _reference(x_nchw, wq, bq, wk, bk, wv, bv, gamma):
    """Pure-JAX reference mirroring the PyTorch forward exactly."""
    B, C, H, W = x_nchw.shape
    N = H * W
    x = x_nchw.reshape(B, C, N)                                   # (B, C, N)
    q = jnp.einsum('oc,bcn->bon', wq, x) + bq[None, :, None]      # (B, Cq, N)
    k = jnp.einsum('oc,bcn->bon', wk, x) + bk[None, :, None]      # (B, Cq, N)
    v = jnp.einsum('oc,bcn->bon', wv, x) + bv[None, :, None]      # (B, C, N)
    attn = jnp.einsum('bci,bcj->bij', q, k)                       # (B, N, N)
    attn = jax.nn.softmax(attn, axis=-1)
    out = jnp.einsum('bcj,bij->bci', v, attn)                     # (B, C, N)
    out = out.reshape(B, C, H, W)
    return gamma * out + x_nchw


if __name__ == "__main__":
    key = jax.random.PRNGKey(0)
    B, C, H, W = 2, 32, 16, 16          # N = 256
    Cq = C // 8

    k0, k1, k2, k3, k4, k5, k6 = jax.random.split(key, 7)
    x = jax.random.normal(k0, (B, C, H, W), dtype=jnp.float32)
    wq = jax.random.normal(k1, (Cq, C), dtype=jnp.float32) * 0.1
    bq = jax.random.normal(k2, (Cq,), dtype=jnp.float32) * 0.1
    wk = jax.random.normal(k3, (Cq, C), dtype=jnp.float32) * 0.1
    bk = jax.random.normal(k4, (Cq,), dtype=jnp.float32) * 0.1
    wv = jax.random.normal(k5, (C, C), dtype=jnp.float32) * 0.1
    bv = jax.random.normal(k6, (C,), dtype=jnp.float32) * 0.1
    # PyTorch init uses gamma=0 (output == input); use a nonzero deterministic value so
    # the attention path is actually exercised.
    gamma = jnp.array([0.5], dtype=jnp.float32)

    ref = _reference(x, wq, bq, wk, bk, wv, bv, gamma)

    # f32 MXU operands, tq=128 -> two query tiles per image (exercises tiling).
    out = jax.block_until_ready(
        self_attention(x, wq, bq, wk, bk, wv, bv, gamma, tq=128))
    assert out.shape == x.shape
    assert jnp.allclose(out, ref, atol=5e-3, rtol=5e-3), "f32 kernel mismatch vs reference"

    # bf16 MXU operands + bf16 exp (v6e/v7x path), default tile selection.
    out_bf16 = jax.block_until_ready(
        self_attention(x, wq, bq, wk, bk, wv, bv, gamma, compute_dtype=jnp.bfloat16))
    assert out_bf16.shape == x.shape
    assert jnp.allclose(out_bf16, ref, atol=1e-1, rtol=1e-1), "bf16 kernel mismatch vs reference"

    print("KERNEL_OK")
</pallas_src>

<mosaic_0001>
module attributes {stable_mosaic.version = 11 : i64} {
  func.func @_self_attention_kernel(%arg0: i32, %arg1: i32, %arg2: memref<1x128x8xf32, #tpu.memory_space<vmem>>, %arg3: memref<1x48x256xf32, #tpu.memory_space<vmem>>, %arg4: memref<1x32x128xf32, #tpu.memory_space<vmem>>, %arg5: memref<1x1xf32, #tpu.memory_space<smem>>, %arg6: memref<1x32x128xf32, #tpu.memory_space<vmem>>) attributes {dimension_semantics = [#tpu.dimension_semantics<parallel>, #tpu.dimension_semantics<parallel>], iteration_bounds = array<i64: 2, 2>, scalar_prefetch = 0 : i64, scratch_operands = 0 : i64, tpu.core_type = #tpu.core_type<tc>, window_params = [{transform_indices = @transform_0, window_bounds = array<i64: 1, 128, 8>}, {transform_indices = @transform_1, window_bounds = array<i64: 1, 48, 256>}, {transform_indices = @transform_2, window_bounds = array<i64: 1, 32, 128>}, {transform_indices = @transform_3, window_bounds = array<i64: 1, 1>}, {transform_indices = @transform_4, window_bounds = array<i64: 1, 32, 128>}]} {
    %c0 = arith.constant 0 : index
    %c0_0 = arith.constant 0 : index
    %c0_1 = arith.constant 0 : index
    %0 = vector.load %arg2[%c0, %c0_0, %c0_1] : memref<1x128x8xf32, #tpu.memory_space<vmem>>, vector<1x128x8xf32>
    %1 = vector.shape_cast %0 : vector<1x128x8xf32> to vector<128x8xf32>
    %c0_2 = arith.constant 0 : index
    %c0_3 = arith.constant 0 : index
    %c0_4 = arith.constant 0 : index
    %2 = vector.load %arg3[%c0_2, %c0_3, %c0_4] : memref<1x48x256xf32, #tpu.memory_space<vmem>>, vector<1x8x256xf32>
    %3 = vector.shape_cast %2 : vector<1x8x256xf32> to vector<8x256xf32>
    %c0_5 = arith.constant 0 : index
    %c8 = arith.constant 8 : index
    %c0_6 = arith.constant 0 : index
    %4 = vector.load %arg3[%c0_5, %c8, %c0_6] : memref<1x48x256xf32, #tpu.memory_space<vmem>>, vector<1x40x256xf32>
    %5 = vector.shape_cast %4 : vector<1x40x256xf32> to vector<40x256xf32>
    %cst = arith.constant dense<0.000000e+00> : vector<128x256xf32>
    %6 = tpu.matmul %1, %3, %cst {dimension_numbers = #tpu.dot_dimension_numbers<[1], [0], [0], [1], [0, 0, 1, 1], [], []>} : vector<128x8xf32>, vector<8x256xf32>, vector<128x256xf32> -> vector<128x256xf32>
    %cst_7 = arith.constant dense<0xFF800000> : vector<128xf32>
    %7 = vector.multi_reduction <maximumf>, %6, %cst_7 [1] : vector<128x256xf32> to vector<128xf32>
    %8 = vector.shape_cast %7 : vector<128xf32> to vector<128x1xf32>
    %9 = vector.broadcast %8 : vector<128x1xf32> to vector<128x256xf32>
    %10 = arith.subf %6, %9 : vector<128x256xf32>
    %11 = math.exp %10 : vector<128x256xf32>
    %cst_8 = arith.constant dense<0.000000e+00> : vector<40x128xf32>
    %12 = tpu.matmul %5, %11, %cst_8 {dimension_numbers = #tpu.dot_dimension_numbers<[1], [1], [0], [0], [0, 0, 1, 0], [], []>} : vector<40x256xf32>, vector<128x256xf32>, vector<40x128xf32> -> vector<40x128xf32>
    %13 = vector.extract_strided_slice %12 {offsets = [32, 0], sizes = [1, 128], strides = [1, 1]} : vector<40x128xf32> to vector<1x128xf32>
    %14 = tpu.reciprocal %13 {approx = true} : vector<1x128xf32> -> vector<1x128xf32>
    %c0_9 = arith.constant 0 : index
    %c0_10 = arith.constant 0 : index
    %15 = memref.load %arg5[%c0_9, %c0_10] : memref<1x1xf32, #tpu.memory_space<smem>>
    %16 = vector.broadcast %15 : f32 to vector<1x128xf32>
    %17 = arith.mulf %16, %14 : vector<1x128xf32>
    %18 = vector.extract_strided_slice %12 {offsets = [0, 0], sizes = [32, 128], strides = [1, 1]} : vector<40x128xf32> to vector<32x128xf32>
    %19 = vector.broadcast %17 : vector<1x128xf32> to vector<32x128xf32>
    %20 = arith.mulf %18, %19 : vector<32x128xf32>
    %c0_11 = arith.constant 0 : index
    %c0_12 = arith.constant 0 : index
    %c0_13 = arith.constant 0 : index
    %21 = vector.load %arg4[%c0_11, %c0_12, %c0_13] : memref<1x32x128xf32, #tpu.memory_space<vmem>>, vector<1x32x128xf32>
    %22 = vector.shape_cast %21 : vector<1x32x128xf32> to vector<32x128xf32>
    %23 = arith.addf %20, %22 : vector<32x128xf32>
    %c0_14 = arith.constant 0 : index
    %c0_15 = arith.constant 0 : index
    %c0_16 = arith.constant 0 : index
    %24 = vector.load %arg6[%c0_14, %c0_15, %c0_16] : memref<1x32x128xf32, #tpu.memory_space<vmem>>, vector<1x32x128xf32>
    %25 = vector.shape_cast %24 : vector<1x32x128xf32> to vector<32x128xf32>
    %26 = vector.shape_cast %23 : vector<32x128xf32> to vector<1x32x128xf32>
    tpu.vector_store %arg6[%c0_14, %c0_15, %c0_16], %26 {strides = array<i32>} : memref<1x32x128xf32, #tpu.memory_space<vmem>>, vector<1x32x128xf32>,
    return
  }
  func.func @transform_0(%arg0: i32, %arg1: i32) -> (i32, i32, i32) {
    %c0_i32 = arith.constant 0 : i32
    %c0_i32_0 = arith.constant 0 : i32
    return %arg0, %arg1, %c0_i32 : i32, i32, i32
  }
  func.func @transform_1(%arg0: i32, %arg1: i32) -> (i32, i32, i32) {
    %c0_i32 = arith.constant 0 : i32
    %c0_i32_0 = arith.constant 0 : i32
    %c0_i32_1 = arith.constant 0 : i32
    return %arg0, %c0_i32, %c0_i32_0 : i32, i32, i32
  }
  func.func @transform_2(%arg0: i32, %arg1: i32) -> (i32, i32, i32) {
    %c0_i32 = arith.constant 0 : i32
    %c0_i32_0 = arith.constant 0 : i32
    return %arg0, %c0_i32, %arg1 : i32, i32, i32
  }
  func.func @transform_3(%arg0: i32, %arg1: i32) -> (i32, i32) {
    %c0_i32 = arith.constant 0 : i32
    %c0_i32_0 = arith.constant 0 : i32
    %c0_i32_1 = arith.constant 0 : i32
    return %c0_i32, %c0_i32_0 : i32, i32
  }
  func.func @transform_4(%arg0: i32, %arg1: i32) -> (i32, i32, i32) {
    %c0_i32 = arith.constant 0 : i32
    %c0_i32_0 = arith.constant 0 : i32
    return %arg0, %c0_i32, %arg1 : i32, i32, i32
  }
}

</mosaic_0001>

<llo_original>
// kernel: tpu_custom_call.1
$region0: #{tpu_custom_call.1}
  #allocation0 [shape = 'u32[]', space=smem, size = 0x4, offset = 0x4, fixed_abs, tag = 'smem constant byte address 0x4 - core index']
  #allocation1 [shape = 'u32[144,128]{1,0:T(1,128)}', space=vmem, size = 0x12000, scoped, tag = 'internal scratch']
  #allocation2 [shape = 'f32[1,1]{1,0:T(1,128)S(6)}', space=smem, size = 0x200, scoped, tag = 'scoped memory for tpu_custom_call.1']
  %s0 = inlined_call_operand.vmem [shape: f32[2,256,8], index: 0, kind: input, shape index: {}]
  %s1 = inlined_call_operand.vmem [shape: f32[2,48,256], index: 1, kind: input, shape index: {}]
  %s2 = inlined_call_operand.vmem [shape: f32[2,32,256], index: 2, kind: input, shape index: {}]
  %s3 = inlined_call_operand.<no memory space> [shape: f32[1,1], index: 3, kind: input, shape index: {}]
  %s4 = inlined_call_operand.hbm [shape: f32[2,32,256], index: 4, kind: output, shape index: {}]
  %s5 = sld [smem:[#allocation0]]
  $region87: #{tpu_custom_call.1} parent=0
    _
  %s7 = ssub.s32 1, %s5
  %s8 = scalar_select 0, %s7, %s5
  %9 = sst [smem:[#allocation2]] %s3
  $region1: #{tpu_custom_call.1} parent=0
    #allocation3 [shape = 'u8[32768]{0}', space=vmem, size = 0x8000, scoped, tag = 'input window, operand 2']
    #allocation4 [shape = 'u8[32768]{0}', space=vmem, size = 0x8000, scoped, tag = 'output window, operand 0']
    #allocation5 [shape = 's32[2]{0}', space=sflag, size = 0x8, scoped, tag = 'scoped memory for tpu_custom_call.1']
    %10 = vsyncpa [#allocation5], 0
    %s11 = scalar_lea.sflag [#allocation5], 1
    %12 = vsyncpa %s11, 0
    loop: start=0, step=1, limit=6
    $region2: #{tpu_custom_call.1} parent=1 // loop_pre_header
      _
    $region3: #{tpu_custom_call.1} parent=1 // loop_header
      %s14 = sphi 0, %s18
      %p15 = scmp.ge.s32.totalorder %s14, 6
      %s21 = sphi 0, %s33
      %s22 = sphi 0, %s29
      %s23 = sphi 0, %s21
      %s24 = sphi 0, %s22
      %s25 = sphi 0, %s23
      %s26 = sphi 0, %s24
      %s38 = sphi 0, %s40
      %s41 = sphi 0, %s38
      %s42 = sphi 0, %s41
      %s58 = sphi 0, %s42
      %s64 = sphi 0, %s66
      %s67 = sphi 0, %s64
      %s68 = sphi 0, %s67
      %s84 = sphi 0, %s68
      %s92 = sphi 0, %s94
      %s95 = sphi 0, %s92
      %s96 = sphi 0, %s95
      %s112 = sphi 0, %s96
      %s116 = sphi 0, %s116
      %s118 = sphi 0, %s116
      %s119 = sphi 0, %s118
      %s133 = sphi 0, %s119
      %s141 = sphi 0, %s143
      %s144 = sphi 0, %s141
      %s145 = sphi 0, %s144
      %s161 = sphi 0, %s145
    $region4: #{tpu_custom_call.1} parent=1 // loop_header_branch
      %17 = sbr.rel (%p15) target = $region8
    $region5: #{tpu_custom_call.1} parent=1 // loop_body
      %s19 = ssub.s32 %s14, 1
      %s20 = ssub.s32 %s14, 2
      %s27 = sadd.s32 1, %s22
      %p28 = scmp.ge.s32.totalorder %s27, 2
      %s29 = scalar_select %p28, 0, %s27
      %s30 = sadd.s32 1, %s21
      %s31 = scalar_select %p28, %s30, %s21
      %p32 = scmp.ge.s32.totalorder %s31, 2
      %s33 = scalar_select %p32, 0, %s31
      %s34 = ssub.s32 %s21, %s33
      %s35 = ssub.s32 %s22, %s29
      %s36 = sor.u32 %s34, %s35
      %p37 = scmp.eq.s32.totalorder %s36, 0
      %s39 = sadd.s32 %s38, 1
      %s40 = scalar_select %p37, %s38, %s39
      %p43 = pneg %p37
      %p44 = scmp.eq.s32.totalorder %s14, 3
      %p45 = por %p43, %p44
      %p46 = scmp.ne.s32.totalorder %s38, %s41
      %p47 = scmp.eq.s32.totalorder %s14, 0
      %p48 = por %p46, %p47
      %p49 = scmp.ne.s32.totalorder %s38, %s41
      %p50 = scmp.eq.s32.totalorder %s19, 3
      %p51 = por %p49, %p50
      %p52 = scmp.ne.s32.totalorder %s41, %s42
      %p53 = scmp.eq.s32.totalorder %s19, 0
      %p54 = por %p52, %p53
      %p55 = scmp.ne.s32.totalorder %s41, %s42
      %p56 = scmp.eq.s32.totalorder %s20, 3
      %p57 = por %p55, %p56
      %p59 = scmp.ne.s32.totalorder %s42, %s58
      %p60 = scmp.eq.s32.totalorder %s20, 0
      %p61 = por %p59, %p60
      %s62 = ssub.s32 %s21, %s33
      %p63 = scmp.eq.s32.totalorder %s62, 0
      %s65 = sadd.s32 %s64, 1
      %s66 = scalar_select %p63, %s64, %s65
      %p69 = pneg %p63
      %p70 = scmp.eq.s32.totalorder %s14, 3
      %p71 = por %p69, %p70
      %p72 = scmp.ne.s32.totalorder %s64, %s67
      %p73 = scmp.eq.s32.totalorder %s14, 0
      %p74 = por %p72, %p73
      %p75 = scmp.ne.s32.totalorder %s64, %s67
      %p76 = scmp.eq.s32.totalorder %s19, 3
      %p77 = por %p75, %p76
      %p78 = scmp.ne.s32.totalorder %s67, %s68
      %p79 = scmp.eq.s32.totalorder %s19, 0
      %p80 = por %p78, %p79
      %p81 = scmp.ne.s32.totalorder %s67, %s68
      %p82 = scmp.eq.s32.totalorder %s20, 3
      %p83 = por %p81, %p82
      %p85 = scmp.ne.s32.totalorder %s68, %s84
      %p86 = scmp.eq.s32.totalorder %s20, 0
      %p87 = por %p85, %p86
      %s88 = ssub.s32 %s21, %s33
      %s89 = ssub.s32 %s22, %s29
      %s90 = sor.u32 %s88, %s89
      %p91 = scmp.eq.s32.totalorder %s90, 0
      %s93 = sadd.s32 %s92, 1
      %s94 = scalar_select %p91, %s92, %s93
      %p97 = pneg %p91
      %p98 = scmp.eq.s32.totalorder %s14, 3
      %p99 = por %p97, %p98
      %p100 = scmp.ne.s32.totalorder %s92, %s95
      %p101 = scmp.eq.s32.totalorder %s14, 0
      %p102 = por %p100, %p101
      %p103 = scmp.ne.s32.totalorder %s92, %s95
      %p104 = scmp.eq.s32.totalorder %s19, 3
      %p105 = por %p103, %p104
      %p106 = scmp.ne.s32.totalorder %s95, %s96
      %p107 = scmp.eq.s32.totalorder %s19, 0
      %p108 = por %p106, %p107
      %p109 = scmp.ne.s32.totalorder %s95, %s96
      %p110 = scmp.eq.s32.totalorder %s20, 3
      %p111 = por %p109, %p110
      %p113 = scmp.ne.s32.totalorder %s96, %s112
      %p114 = scmp.eq.s32.totalorder %s20, 0
      %p115 = por %p113, %p114
      %s117 = sadd.s32 %s116, 1
      %p120 = scmp.eq.s32.totalorder %s14, 3
      %p121 = scmp.ne.s32.totalorder %s116, %s118
      %p122 = scmp.eq.s32.totalorder %s14, 0
      %p123 = por %p121, %p122
      %p124 = scmp.ne.s32.totalorder %s116, %s118
      %p125 = scmp.eq.s32.totalorder %s19, 3
      %p126 = por %p124, %p125
      %p127 = scmp.ne.s32.totalorder %s118, %s119
      %p128 = scmp.eq.s32.totalorder %s19, 0
      %p129 = por %p127, %p128
      %p130 = scmp.ne.s32.totalorder %s118, %s119
      %p131 = scmp.eq.s32.totalorder %s20, 3
      %p132 = por %p130, %p131
      %p134 = scmp.ne.s32.totalorder %s119, %s133
      %p135 = scmp.eq.s32.totalorder %s20, 0
      %p136 = por %p134, %p135
      %s137 = ssub.s32 %s21, %s33
      %s138 = ssub.s32 %s22, %s29
      %s139 = sor.u32 %s137, %s138
      %p140 = scmp.eq.s32.totalorder %s139, 0
      %s142 = sadd.s32 %s141, 1
      %s143 = scalar_select %p140, %s141, %s142
      %p146 = pneg %p140
      %p147 = scmp.eq.s32.totalorder %s14, 3
      %p148 = por %p146, %p147
      %p149 = scmp.ne.s32.totalorder %s141, %s144
      %p150 = scmp.eq.s32.totalorder %s14, 0
      %p151 = por %p149, %p150
      %p152 = scmp.ne.s32.totalorder %s141, %s144
      %p153 = scmp.eq.s32.totalorder %s19, 3
      %p154 = por %p152, %p153
      %p155 = scmp.ne.s32.totalorder %s144, %s145
      %p156 = scmp.eq.s32.totalorder %s19, 0
      %p157 = por %p155, %p156
      %p158 = scmp.ne.s32.totalorder %s144, %s145
      %p159 = scmp.eq.s32.totalorder %s20, 3
      %p160 = por %p158, %p159
      %p162 = scmp.ne.s32.totalorder %s145, %s161
      %p163 = scmp.eq.s32.totalorder %s20, 0
      %p164 = por %p162, %p163
      %p165 = scmp.le.s32.totalorder 1, %s14
      %p166 = scmp.lt.s32.totalorder %s14, 5
      %p167 = pnand %p165, %p166
      %p168 = pneg %p167
      // Predicated region
      $region9: #{tpu_custom_call.1} parent=5 // pred_check
        _
      $region10: #{tpu_custom_call.1} parent=5 // pred_check_branch
        %170 = sbr.rel (%p167) target = $region12
      $region11: #{tpu_custom_call.1} parent=5 // pred_region
        %s171 = ssub.s32 %s14, 1
        // Predicated region
        $region13: #{tpu_custom_call.1} parent=11 // pred_check
          %p172 = pneg %p129
        $region14: #{tpu_custom_call.1} parent=11 // pred_check_branch
          %174 = sbr.rel (%p172) target = $region16
        $region15: #{tpu_custom_call.1} parent=11 // pred_region
          _
        $region16: #{tpu_custom_call.1} parent=11 // pred_fallthru
          _
      $region12: #{tpu_custom_call.1} parent=5 // pred_fallthru
        _
      %p175 = scmp.lt.s32.totalorder %s14, 4
      // Predicated region
      $region17: #{tpu_custom_call.1} parent=5 // pred_check
        %p176 = pneg %p175
      $region18: #{tpu_custom_call.1} parent=5 // pred_check_branch
        %178 = sbr.rel (%p176) target = $region20
      $region19: #{tpu_custom_call.1} parent=5 // pred_region
        // Predicated region
        $region21: #{tpu_custom_call.1} parent=19 // pred_check
          %p179 = pneg %p48
        $region22: #{tpu_custom_call.1} parent=19 // pred_check_branch
          %181 = sbr.rel (%p179) target = $region24
        $region23: #{tpu_custom_call.1} parent=19 // pred_region
          %s182 = smul.u32 16, %s22
          %p183 = scmp.lt.s32.totalorder %s21, 1
          %s184 = scalar_select %p183, %s21, 1
          %p185 = scmp.lt.s32.totalorder %s182, 31
          %s186 = scalar_select %p185, %s182, 31
          %s187 = smul.addr %s184, 32
          %s188 = sadd.s32 %s186, %s187
          %s189 = smul.addr %s188, 8
          %s190 = scalar_lea.vmem %s0, %s189
          %s191 = smul.u32 16, %s22
        $region24: #{tpu_custom_call.1} parent=19 // pred_fallthru
          _
        // Predicated region
        $region25: #{tpu_custom_call.1} parent=19 // pred_check
          %p192 = pneg %p74
        $region26: #{tpu_custom_call.1} parent=19 // pred_check_branch
          %194 = sbr.rel (%p192) target = $region28
        $region27: #{tpu_custom_call.1} parent=19 // pred_region
          %p195 = scmp.lt.s32.totalorder %s21, 1
          %s196 = scalar_select %p195, %s21, 1
          %s197 = smul.addr %s196, 12
          %s198 = smul.addr %s197, 8
          %s199 = scalar_lea.vmem %s1, %s198
        $region28: #{tpu_custom_call.1} parent=19 // pred_fallthru
          _
        // Predicated region
        $region29: #{tpu_custom_call.1} parent=19 // pred_check
          %p200 = pneg %p102
        $region30: #{tpu_custom_call.1} parent=19 // pred_check_branch
          %202 = sbr.rel (%p200) target = $region32
        $region31: #{tpu_custom_call.1} parent=19 // pred_region
          %s203 = sand.u32 %s92, 1
          %s204 = sand.u32 %s92, 1
          %s205 = smul.addr %s204, 32
          %s206 = scalar_lea.vmem [#allocation3], %s205
          %s207 = smul.addr %s21, 8
          %s208 = sadd.s32 %s22, %s207
          %s209 = smul.addr %s208, 8
          %s210 = scalar_lea.vmem %s2, %s209
          // Predicated region
          $region33: #{tpu_custom_call.1} parent=31 // pred_check
            _
          $region34: #{tpu_custom_call.1} parent=31 // pred_check_branch
            %212 = sbr.rel (0) target = $region36
          $region35: #{tpu_custom_call.1} parent=31 // pred_region
            // Predicated region
            $region37: #{tpu_custom_call.1} parent=35 // pred_check
              _
            $region38: #{tpu_custom_call.1} parent=35 // pred_check_branch
              %214 = sbr.rel (0) target = $region40
            $region39: #{tpu_custom_call.1} parent=35 // pred_region
              // Predicated region
              $region52: #{tpu_custom_call.1} parent=39 // pred_check
                _
              $region53: #{tpu_custom_call.1} parent=39 // pred_check_branch
                %235 = sbr.rel (0) target = $region55
              $region54: #{tpu_custom_call.1} parent=39 // pred_region
                loop: start=0, step=1, limit=1
                $region56: #{tpu_custom_call.1} parent=54 // loop_pre_header
                  _
                $region57: #{tpu_custom_call.1} parent=54 // loop_header
                  %s237 = sphi 0, %s241
                  %p238 = scmp.ge.s32.totalorder %s237, 1
                  %s242 = sphi %s210, %s210
                  %s243 = sphi %s206, %s206
                $region58: #{tpu_custom_call.1} parent=54 // loop_header_branch
                  %240 = sbr.rel (%p238) target = $region62
                $region59: #{tpu_custom_call.1} parent=54 // loop_body
                  %v244 = vld [vmem:[%s242] sm:$0xff]
                  %245 = vst [vmem:[%s243] sm:$0xff] %v244
                  %v246 = vld [vmem:[%s242 + $0x10] sm:$0xff]
                  %247 = vst [vmem:[%s243 + $0x8] sm:$0xff] %v246
                  %v248 = vld [vmem:[%s242 + $0x20] sm:$0xff]
                  %249 = vst [vmem:[%s243 + $0x10] sm:$0xff] %v248
                  %v250 = vld [vmem:[%s242 + $0x30] sm:$0xff]
                  %251 = vst [vmem:[%s243 + $0x18] sm:$0xff] %v250
                $region60: #{tpu_custom_call.1} parent=54 // loop_footer
                  %s241 = sadd.s32 1, %s237
                $region61: #{tpu_custom_call.1} parent=54 // loop_footer_branch
                  %236 = sbr.rel target = $region57
                $region62: #{tpu_custom_call.1} parent=54 // loop_exit
                  _
              $region55: #{tpu_custom_call.1} parent=39 // pred_fallthru
                _
              // Predicated region
              $region63: #{tpu_custom_call.1} parent=39 // pred_check
                _
              $region64: #{tpu_custom_call.1} parent=39 // pred_check_branch
                %253 = sbr.rel target = $region66
              $region65: #{tpu_custom_call.1} parent=39 // pred_region
                _
              $region66: #{tpu_custom_call.1} parent=39 // pred_fallthru
                _
            $region40: #{tpu_custom_call.1} parent=35 // pred_fallthru
              _
            // Predicated region
            $region41: #{tpu_custom_call.1} parent=35 // pred_check
              _
            $region42: #{tpu_custom_call.1} parent=35 // pred_check_branch
              %216 = sbr.rel target = $region44
            $region43: #{tpu_custom_call.1} parent=35 // pred_region
              loop: start=0, step=1, limit=1
              $region45: #{tpu_custom_call.1} parent=43 // loop_pre_header
                _
              $region46: #{tpu_custom_call.1} parent=43 // loop_header
                %s219 = sphi 0, %s223
                %p220 = scmp.ge.s32.totalorder %s219, 1
                %s224 = sphi %s210, %s210
                %s225 = sphi %s206, %s206
              $region47: #{tpu_custom_call.1} parent=43 // loop_header_branch
                %222 = sbr.rel (%p220) target = $region51
              $region48: #{tpu_custom_call.1} parent=43 // loop_body
                %v226 = vld [vmem:[%s224] sm:$0xff]
                %227 = vst [vmem:[%s225] sm:$0xff] %v226
                %v228 = vld [vmem:[%s224 + $0x10] sm:$0xff]
                %229 = vst [vmem:[%s225 + $0x8] sm:$0xff] %v228
                %v230 = vld [vmem:[%s224 + $0x20] sm:$0xff]
                %231 = vst [vmem:[%s225 + $0x10] sm:$0xff] %v230
                %v232 = vld [vmem:[%s224 + $0x30] sm:$0xff]
                %233 = vst [vmem:[%s225 + $0x18] sm:$0xff] %v232
              $region49: #{tpu_custom_call.1} parent=43 // loop_footer
                %s223 = sadd.s32 1, %s219
              $region50: #{tpu_custom_call.1} parent=43 // loop_footer_branch
                %218 = sbr.rel target = $region46
              $region51: #{tpu_custom_call.1} parent=43 // loop_exit
                _
            $region44: #{tpu_custom_call.1} parent=35 // pred_fallthru
              _
          $region36: #{tpu_custom_call.1} parent=31 // pred_fallthru
            _
          %254 = vnop
        $region32: #{tpu_custom_call.1} parent=19 // pred_fallthru
          _
      $region20: #{tpu_custom_call.1} parent=5 // pred_fallthru
        _
      %p255 = scmp.le.s32.totalorder 1, %s14
      %p256 = scmp.lt.s32.totalorder %s14, 5
      %p257 = pnand %p255, %p256
      %p258 = pneg %p257
      // Predicated region
      $region67: #{tpu_custom_call.1} parent=5 // pred_check
        _
      $region68: #{tpu_custom_call.1} parent=5 // pred_check_branch
        %260 = sbr.rel (%p257) target = $region70
      $region69: #{tpu_custom_call.1} parent=5 // pred_region
        %s261 = ssub.s32 %s14, 1
        %s262 = sand.u32 %s95, 1
        %s263 = sand.u32 %s95, 1
        %s264 = smul.addr %s263, 32
        %s265 = scalar_lea.vmem [#allocation3], %s264
        // Predicated region
        $region71: #{tpu_custom_call.1} parent=69 // pred_check
          %p266 = pneg %p108
        $region72: #{tpu_custom_call.1} parent=69 // pred_check_branch
          %268 = sbr.rel (%p266) target = $region74
        $region73: #{tpu_custom_call.1} parent=69 // pred_region
          _
        $region74: #{tpu_custom_call.1} parent=69 // pred_fallthru
          _
        %s269 = smul.u32 16, %s24
        %p270 = scmp.lt.s32.totalorder %s23, 1
        %s271 = scalar_select %p270, %s23, 1
        %p272 = scmp.lt.s32.totalorder %s269, 31
        %s273 = scalar_select %p272, %s269, 31
        %s274 = smul.addr %s271, 32
        %s275 = sadd.s32 %s273, %s274
        %s276 = smul.addr %s275, 8
        %s277 = scalar_lea.vmem %s0, %s276
        %p278 = pneg %p54
        %p279 = pneg %p51
        %p280 = scmp.lt.s32.totalorder %s23, 1
        %s281 = scalar_select %p280, %s23, 1
        %s282 = smul.addr %s281, 12
        %s283 = smul.addr %s282, 8
        %s284 = scalar_lea.vmem %s1, %s283
        %p285 = pneg %p80
        %p286 = pneg %p77
        %s287 = sand.u32 %s95, 1
        %s288 = sand.u32 %s95, 1
        %s289 = smul.addr %s288, 32
        %s290 = scalar_lea.vmem [#allocation3], %s289
        %p291 = pneg %p108
        %p292 = pneg %p105
        %p293 = pneg %p129
        %p294 = pneg %p126
        %p295 = pneg %p157
        %p296 = pneg %p154
        %s297 = sand.u32 %s144, 1
        %s298 = scalar_lea.sflag [#allocation5], %s297
        %s299 = sand.u32 %s144, 1
        %s300 = smul.addr %s299, 32
        %s301 = scalar_lea.vmem [#allocation4], %s300
        %s302 = smul.u32 16, %s24
        %p303 = scmp.lt.s32.totalorder %s23, 1
        %s304 = scalar_select %p303, %s23, 1
        %p305 = scmp.lt.s32.totalorder %s302, 31
        %s306 = scalar_select %p305, %s302, 31
        %s307 = smul.addr %s304, 32
        %s308 = sadd.s32 %s306, %s307
        %s309 = smul.addr %s308, 8
        %s310 = scalar_lea.vmem %s0, %s309
        %s311 = smul.u32 16, %s24
        %p312 = scmp.lt.s32.totalorder %s23, 1
        %s313 = scalar_select %p312, %s23, 1
        %s314 = smul.addr %s313, 12
        %s315 = smul.addr %s314, 8
        %s316 = scalar_lea.vmem %s1, %s315
        %v317 = vld [vmem:[%s310] sm:$0xff]
        %v318 = vld [vmem:[%s310 + $0x8] sm:$0xff]
        %v319 = vld [vmem:[%s310 + $0x10] sm:$0xff]
        %v320 = vld [vmem:[%s310 + $0x18] sm:$0xff]
        %v321 = vld [vmem:[%s310 + $0x20] sm:$0xff]
        %v322 = vld [vmem:[%s310 + $0x28] sm:$0xff]
        %v323 = vld [vmem:[%s310 + $0x30] sm:$0xff]
        %v324 = vld [vmem:[%s310 + $0x38] sm:$0xff]
        %v325 = vld [vmem:[%s310 + $0x40] sm:$0xff]
        %v326 = vld [vmem:[%s310 + $0x48] sm:$0xff]
        %v327 = vld [vmem:[%s310 + $0x50] sm:$0xff]
        %v328 = vld [vmem:[%s310 + $0x58] sm:$0xff]
        %v329 = vld [vmem:[%s310 + $0x60] sm:$0xff]
        %v330 = vld [vmem:[%s310 + $0x68] sm:$0xff]
        %v331 = vld [vmem:[%s310 + $0x70] sm:$0xff]
        %v332 = vld [vmem:[%s310 + $0x78] sm:$0xff]
        %v333 = vld [vmem:[%s316] sm:$0xff]
        %v334 = vld [vmem:[%s316 + $0x8] sm:$0xff]
        %v335 = vld [vmem:[%s316 + $0x10] sm:$0xff]
        %v336 = vld [vmem:[%s316 + $0x18] sm:$0xff]
        %v337 = vld [vmem:[%s316 + $0x20] sm:$0xff]
        %v338 = vld [vmem:[%s316 + $0x28] sm:$0xff]
        %v339 = vld [vmem:[%s316 + $0x30] sm:$0xff]
        %v340 = vld [vmem:[%s316 + $0x38] sm:$0xff]
        %v341 = vld [vmem:[%s316 + $0x40] sm:$0xff]
        %v342 = vld [vmem:[%s316 + $0x48] sm:$0xff]
        %v343 = vld [vmem:[%s316 + $0x50] sm:$0xff]
        %v344 = vld [vmem:[%s316 + $0x58] sm:$0xff]
        %vm345 = vcmask 64512
        %v347 = vsel %vm345, %v317, 0
        %v350 = vsel %vm345, %v318, 0
        %v353 = vsel %vm345, %v319, 0
        %v356 = vsel %vm345, %v320, 0
        %v359 = vsel %vm345, %v321, 0
        %v362 = vsel %vm345, %v322, 0
        %v365 = vsel %vm345, %v323, 0
        %v368 = vsel %vm345, %v324, 0
        %v371 = vsel %vm345, %v325, 0
        %v374 = vsel %vm345, %v326, 0
        %v377 = vsel %vm345, %v327, 0
        %v380 = vsel %vm345, %v328, 0
        %v383 = vsel %vm345, %v329, 0
        %v386 = vsel %vm345, %v330, 0
        %v389 = vsel %vm345, %v331, 0
        %v392 = vsel %vm345, %v332, 0
        %394 = vmatprep.subr.mxu0 %v334
        %395 = vmatpush1.msra.mxu0 %v333
        %396 = vmatprep.subr.mxu0 0.0
        %397 = vmatpush1.msra.mxu0 0.0
        %398 = vmatprep.subr.mxu0 0.0
        %399 = vmatpush1.msra.mxu0 0.0
        %400 = vmatprep.subr.mxu0 0.0
        %401 = vmatpush1.msra.mxu0 0.0
        %402 = vmatprep.subr.mxu0 0.0
        %403 = vmatpush1.msra.mxu0 0.0
        %404 = vmatprep.subr.mxu0 0.0
        %405 = vmatpush1.msra.mxu0 0.0
        %406 = vmatprep.subr.mxu0 0.0
        %407 = vmatpush1.msra.mxu0 0.0
        %408 = vmatprep.subr.mxu0 0.0
        %409 = vmatpush1.msra.mxu0 0.0
        %410 = vmatprep.subr.mxu0 0.0
        %411 = vmatpush1.msra.mxu0 0.0
        %412 = vmatprep.subr.mxu0 0.0
        %413 = vmatpush1.msra.mxu0 0.0
        %414 = vmatprep.subr.mxu0 0.0
        %415 = vmatpush1.msra.mxu0 0.0
        %416 = vmatprep.subr.mxu0 0.0
        %417 = vmatpush1.msra.mxu0 0.0
        %418 = vmatprep.subr.mxu0 0.0
        %419 = vmatpush1.msra.mxu0 0.0
        %420 = vmatprep.subr.mxu0 0.0
        %421 = vmatpush1.msra.mxu0 0.0
        %422 = vmatprep.subr.mxu0 0.0
        %423 = vmatpush1.msra.mxu0 0.0
        %424 = vmatprep.subr.mxu0 0.0
        %425 = vmatpush1.msra.mxu0 0.0
        %426 = vmatprep.subr.mxu0 0.0
        %427 = vmatpush1.msra.mxu0 0.0
        %428 = vmatprep.subr.mxu0 0.0
        %429 = vmatpush1.msra.mxu0 0.0
        %430 = vmatprep.subr.mxu0 0.0
        %431 = vmatpush1.msra.mxu0 0.0
        %432 = vmatprep.subr.mxu0 0.0
        %433 = vmatpush1.msra.mxu0 0.0
        %434 = vmatprep.subr.mxu0 0.0
        %435 = vmatpush1.msra.mxu0 0.0
        %436 = vmatprep.subr.mxu0 0.0
        %437 = vmatpush1.msra.mxu0 0.0
        %438 = vmatprep.subr.mxu0 0.0
        %439 = vmatpush1.msra.mxu0 0.0
        %440 = vmatprep.subr.mxu0 0.0
        %441 = vmatpush1.msra.mxu0 0.0
        %442 = vmatprep.subr.mxu0 0.0
        %443 = vmatpush1.msra.mxu0 0.0
        %444 = vmatprep.subr.mxu0 0.0
        %445 = vmatpush1.msra.mxu0 0.0
        %446 = vmatprep.subr.mxu0 0.0
        %447 = vmatpush1.msra.mxu0 0.0
        %448 = vmatprep.subr.mxu0 0.0
        %449 = vmatpush1.msra.mxu0 0.0
        %450 = vmatprep.subr.mxu0 0.0
        %451 = vmatpush1.msra.mxu0 0.0
        %452 = vmatprep.subr.mxu0 0.0
        %453 = vmatpush1.msra.mxu0 0.0
        %454 = vmatprep.subr.mxu0 0.0
        %455 = vmatpush1.msra.mxu0 0.0
        %456 = vmatprep.subr.mxu0 0.0
        %457 = vmatpush1.msra.mxu0 0.0
        %458 = vmatprep.mubr.f32.mxu0 0.0
        %459 = vmatmul.mubr.f32.gmra.mrb[0].mxu0 %v347
        %v460 = vpop.f32.mrb[0].mxu0
        %v461 = vadd.f32 0.0, %v460
        %v462 = vpop.f32.mrb[0].mxu0
        %v463 = vadd.f32 0.0, %v462
        %464 = vmatprep.mubr.f32.mxu0 0.0
        %465 = vmatmul.mubr.f32.gmra.mrb[0].mxu0 %v350
        %v466 = vpop.f32.mrb[0].mxu0
        %v467 = vadd.f32 0.0, %v466
        %v468 = vpop.f32.mrb[0].mxu0
        %v469 = vadd.f32 0.0, %v468
        %470 = vmatprep.mubr.f32.mxu0 0.0
        %471 = vmatmul.mubr.f32.gmra.mrb[0].mxu0 %v353
        %v472 = vpop.f32.mrb[0].mxu0
        %v473 = vadd.f32 0.0, %v472
        %v474 = vpop.f32.mrb[0].mxu0
        %v475 = vadd.f32 0.0, %v474
        %476 = vmatprep.mubr.f32.mxu0 0.0
        %477 = vmatmul.mubr.f32.gmra.mrb[0].mxu0 %v356
        %v478 = vpop.f32.mrb[0].mxu0
        %v479 = vadd.f32 0.0, %v478
        %v480 = vpop.f32.mrb[0].mxu0
        %v481 = vadd.f32 0.0, %v480
        %482 = vmatprep.mubr.f32.mxu0 0.0
        %483 = vmatmul.mubr.f32.gmra.mrb[0].mxu0 %v359
        %v484 = vpop.f32.mrb[0].mxu0
        %v485 = vadd.f32 0.0, %v484
        %v486 = vpop.f32.mrb[0].mxu0
        %v487 = vadd.f32 0.0, %v486
        %488 = vmatprep.mubr.f32.mxu0 0.0
        %489 = vmatmul.mubr.f32.gmra.mrb[0].mxu0 %v362
        %v490 = vpop.f32.mrb[0].mxu0
        %v491 = vadd.f32 0.0, %v490
        %v492 = vpop.f32.mrb[0].mxu0
        %v493 = vadd.f32 0.0, %v492
        %494 = vmatprep.mubr.f32.mxu0 0.0
        %495 = vmatmul.mubr.f32.gmra.mrb[0].mxu0 %v365
        %v496 = vpop.f32.mrb[0].mxu0
        %v497 = vadd.f32 0.0, %v496
        %v498 = vpop.f32.mrb[0].mxu0
        %v499 = vadd.f32 0.0, %v498
        %500 = vmatprep.mubr.f32.mxu0 0.0
        %501 = vmatmul.mubr.f32.gmra.mrb[0].mxu0 %v368
        %v502 = vpop.f32.mrb[0].mxu0
        %v503 = vadd.f32 0.0, %v502
        %v504 = vpop.f32.mrb[0].mxu0
        %v505 = vadd.f32 0.0, %v504
        %506 = vmatprep.mubr.f32.mxu0 0.0
        %507 = vmatmul.mubr.f32.gmra.mrb[0].mxu0 %v371
        %v508 = vpop.f32.mrb[0].mxu0
        %v509 = vadd.f32 0.0, %v508
        %v510 = vpop.f32.mrb[0].mxu0
        %v511 = vadd.f32 0.0, %v510
        %512 = vmatprep.mubr.f32.mxu0 0.0
        %513 = vmatmul.mubr.f32.gmra.mrb[0].mxu0 %v374
        %v514 = vpop.f32.mrb[0].mxu0
        %v515 = vadd.f32 0.0, %v514
        %v516 = vpop.f32.mrb[0].mxu0
        %v517 = vadd.f32 0.0, %v516
        %518 = vmatprep.mubr.f32.mxu0 0.0
        %519 = vmatmul.mubr.f32.gmra.mrb[0].mxu0 %v377
        %v520 = vpop.f32.mrb[0].mxu0
        %v521 = vadd.f32 0.0, %v520
        %v522 = vpop.f32.mrb[0].mxu0
        %v523 = vadd.f32 0.0, %v522
        %524 = vmatprep.mubr.f32.mxu0 0.0
        %525 = vmatmul.mubr.f32.gmra.mrb[0].mxu0 %v380
        %v526 = vpop.f32.mrb[0].mxu0
        %v527 = vadd.f32 0.0, %v526
        %v528 = vpop.f32.mrb[0].mxu0
        %v529 = vadd.f32 0.0, %v528
        %530 = vmatprep.mubr.f32.mxu0 0.0
        %531 = vmatmul.mubr.f32.gmra.mrb[0].mxu0 %v383
        %v532 = vpop.f32.mrb[0].mxu0
        %v533 = vadd.f32 0.0, %v532
        %v534 = vpop.f32.mrb[0].mxu0
        %v535 = vadd.f32 0.0, %v534
        %536 = vmatprep.mubr.f32.mxu0 0.0
        %537 = vmatmul.mubr.f32.gmra.mrb[0].mxu0 %v386
        %v538 = vpop.f32.mrb[0].mxu0
        %v539 = vadd.f32 0.0, %v538
        %v540 = vpop.f32.mrb[0].mxu0
        %v541 = vadd.f32 0.0, %v540
        %542 = vmatprep.mubr.f32.mxu0 0.0
        %543 = vmatmul.mubr.f32.gmra.mrb[0].mxu0 %v389
        %v544 = vpop.f32.mrb[0].mxu0
        %v545 = vadd.f32 0.0, %v544
        %v546 = vpop.f32.mrb[0].mxu0
        %v547 = vadd.f32 0.0, %v546
        %548 = vmatprep.mubr.f32.mxu0 0.0
        %549 = vmatmul.mubr.f32.gmra.mrb[0].mxu0 %v392
        %v550 = vpop.f32.mrb[0].mxu0
        %v551 = vadd.f32 0.0, %v550
        %v552 = vpop.f32.mrb[0].mxu0
        %v553 = vadd.f32 0.0, %v552
        %554 = vdwg.mxu0
        %v555 = vmax.f32 %v461, %v463
        %556 = vmax.xlane.f32.xlu0 %v555
        %v557 = vpop.xlane.xlu0 %556
        %v558 = vmax.f32 %v467, %v469
        %559 = vmax.xlane.f32.xlu0 %v558
        %v560 = vpop.xlane.xlu0 %559
        %v561 = vmax.f32 %v473, %v475
        %562 = vmax.xlane.f32.xlu0 %v561
        %v563 = vpop.xlane.xlu0 %562
        %v564 = vmax.f32 %v479, %v481
        %565 = vmax.xlane.f32.xlu0 %v564
        %v566 = vpop.xlane.xlu0 %565
        %v567 = vmax.f32 %v485, %v487
        %568 = vmax.xlane.f32.xlu0 %v567
        %v569 = vpop.xlane.xlu0 %568
        %v570 = vmax.f32 %v491, %v493
        %571 = vmax.xlane.f32.xlu0 %v570
        %v572 = vpop.xlane.xlu0 %571
        %v573 = vmax.f32 %v497, %v499
        %574 = vmax.xlane.f32.xlu0 %v573
        %v575 = vpop.xlane.xlu0 %574
        %v576 = vmax.f32 %v503, %v505
        %577 = vmax.xlane.f32.xlu0 %v576
        %v578 = vpop.xlane.xlu0 %577
        %v579 = vmax.f32 %v509, %v511
        %580 = vmax.xlane.f32.xlu0 %v579
        %v581 = vpop.xlane.xlu0 %580
        %v582 = vmax.f32 %v515, %v517
        %583 = vmax.xlane.f32.xlu0 %v582
        %v584 = vpop.xlane.xlu0 %583
        %v585 = vmax.f32 %v521, %v523
        %586 = vmax.xlane.f32.xlu0 %v585
        %v587 = vpop.xlane.xlu0 %586
        %v588 = vmax.f32 %v527, %v529
        %589 = vmax.xlane.f32.xlu0 %v588
        %v590 = vpop.xlane.xlu0 %589
        %v591 = vmax.f32 %v533, %v535
        %592 = vmax.xlane.f32.xlu0 %v591
        %v593 = vpop.xlane.xlu0 %592
        %v594 = vmax.f32 %v539, %v541
        %595 = vmax.xlane.f32.xlu0 %v594
        %v596 = vpop.xlane.xlu0 %595
        %v597 = vmax.f32 %v545, %v547
        %598 = vmax.xlane.f32.xlu0 %v597
        %v599 = vpop.xlane.xlu0 %598
        %v600 = vmax.f32 %v551, %v553
        %601 = vmax.xlane.f32.xlu0 %v600
        %v602 = vpop.xlane.xlu0 %601
        %v603 = vsub.f32 %v461, %v557
        %v604 = vsub.f32 %v463, %v557
        %v605 = vsub.f32 %v467, %v560
        %v606 = vsub.f32 %v469, %v560
        %v607 = vsub.f32 %v473, %v563
        %v608 = vsub.f32 %v475, %v563
        %v609 = vsub.f32 %v479, %v566
        %v610 = vsub.f32 %v481, %v566
        %v611 = vsub.f32 %v485, %v569
        %v612 = vsub.f32 %v487, %v569
        %v613 = vsub.f32 %v491, %v572
        %v614 = vsub.f32 %v493, %v572
        %v615 = vsub.f32 %v497, %v575
        %v616 = vsub.f32 %v499, %v575
        %v617 = vsub.f32 %v503, %v578
        %v618 = vsub.f32 %v505, %v578
        %v619 = vsub.f32 %v509, %v581
        %v620 = vsub.f32 %v511, %v581
        %v621 = vsub.f32 %v515, %v584
        %v622 = vsub.f32 %v517, %v584
        %v623 = vsub.f32 %v521, %v587
        %v624 = vsub.f32 %v523, %v587
        %v625 = vsub.f32 %v527, %v590
        %v626 = vsub.f32 %v529, %v590
        %v627 = vsub.f32 %v533, %v593
        %v628 = vsub.f32 %v535, %v593
        %v629 = vsub.f32 %v539, %v596
        %v630 = vsub.f32 %v541, %v596
        %v631 = vsub.f32 %v545, %v599
        %v632 = vsub.f32 %v547, %v599
        %v633 = vsub.f32 %v551, %v602
        %v634 = vsub.f32 %v553, %v602
        %v635 = vmul.f32 %v603, 1.442695
        %v636 = vpow.pop %v635
        %v637 = vmul.f32 %v604, 1.442695
        %v638 = vpow.pop %v637
        %v639 = vmul.f32 %v605, 1.442695
        %v640 = vpow.pop %v639
        %v641 = vmul.f32 %v606, 1.442695
        %v642 = vpow.pop %v641
        %v643 = vmul.f32 %v607, 1.442695
        %v644 = vpow.pop %v643
        %v645 = vmul.f32 %v608, 1.442695
        %v646 = vpow.pop %v645
        %v647 = vmul.f32 %v609, 1.442695
        %v648 = vpow.pop %v647
        %v649 = vmul.f32 %v610, 1.442695
        %v650 = vpow.pop %v649
        %v651 = vmul.f32 %v611, 1.442695
        %v652 = vpow.pop %v651
        %v653 = vmul.f32 %v612, 1.442695
        %v654 = vpow.pop %v653
        %v655 = vmul.f32 %v613, 1.442695
        %v656 = vpow.pop %v655
        %v657 = vmul.f32 %v614, 1.442695
        %v658 = vpow.pop %v657
        %v659 = vmul.f32 %v615, 1.442695
        %v660 = vpow.pop %v659
        %v661 = vmul.f32 %v616, 1.442695
        %v662 = vpow.pop %v661
        %v663 = vmul.f32 %v617, 1.442695
        %v664 = vpow.pop %v663
        %v665 = vmul.f32 %v618, 1.442695
        %v666 = vpow.pop %v665
        %v667 = vmul.f32 %v619, 1.442695
        %v668 = vpow.pop %v667
        %v669 = vmul.f32 %v620, 1.442695
        %v670 = vpow.pop %v669
        %v671 = vmul.f32 %v621, 1.442695
        %v672 = vpow.pop %v671
        %v673 = vmul.f32 %v622, 1.442695
        %v674 = vpow.pop %v673
        %v675 = vmul.f32 %v623, 1.442695
        %v676 = vpow.pop %v675
        %v677 = vmul.f32 %v624, 1.442695
        %v678 = vpow.pop %v677
        %v679 = vmul.f32 %v625, 1.442695
        %v680 = vpow.pop %v679
        %v681 = vmul.f32 %v626, 1.442695
        %v682 = vpow.pop %v681
        %v683 = vmul.f32 %v627, 1.442695
        %v684 = vpow.pop %v683
        %v685 = vmul.f32 %v628, 1.442695
        %v686 = vpow.pop %v685
        %v687 = vmul.f32 %v629, 1.442695
        %v688 = vpow.pop %v687
        %v689 = vmul.f32 %v630, 1.442695
        %v690 = vpow.pop %v689
        %v691 = vmul.f32 %v631, 1.442695
        %v692 = vpow.pop %v691
        %v693 = vmul.f32 %v632, 1.442695
        %v694 = vpow.pop %v693
        %v695 = vmul.f32 %v633, 1.442695
        %v696 = vpow.pop %v695
        %v697 = vmul.f32 %v634, 1.442695
        %v698 = vpow.pop %v697
        %699 = vmatprep.subr.mxu0 %v638
        %700 = vmatpush1.xpose.msra.mxu0 %v636
        %701 = vmatprep.subr.mxu0 %v642
        %702 = vmatpush1.xpose.msra.mxu0 %v640
        %703 = vmatprep.subr.mxu0 %v646
        %704 = vmatpush1.xpose.msra.mxu0 %v644
        %705 = vmatprep.subr.mxu0 %v650
        %706 = vmatpush1.xpose.msra.mxu0 %v648
        %707 = vmatprep.subr.mxu0 %v654
        %708 = vmatpush1.xpose.msra.mxu0 %v652
        %709 = vmatprep.subr.mxu0 %v658
        %710 = vmatpush1.xpose.msra.mxu0 %v656
        %711 = vmatprep.subr.mxu0 %v662
        %712 = vmatpush1.xpose.msra.mxu0 %v660
        %713 = vmatprep.subr.mxu0 %v666
        %714 = vmatpush1.xpose.msra.mxu0 %v664
        %715 = vmatprep.subr.mxu0 %v670
        %716 = vmatpush1.xpose.msra.mxu0 %v668
        %717 = vmatprep.subr.mxu0 %v674
        %718 = vmatpush1.xpose.msra.mxu0 %v672
        %719 = vmatprep.subr.mxu0 %v678
        %720 = vmatpush1.xpose.msra.mxu0 %v676
        %721 = vmatprep.subr.mxu0 %v682
        %722 = vmatpush1.xpose.msra.mxu0 %v680
        %723 = vmatprep.subr.mxu0 %v686
        %724 = vmatpush1.xpose.msra.mxu0 %v684
        %725 = vmatprep.subr.mxu0 %v690
        %726 = vmatpush1.xpose.msra.mxu0 %v688
        %727 = vmatprep.subr.mxu0 %v694
        %728 = vmatpush1.xpose.msra.mxu0 %v692
        %729 = vmatprep.subr.mxu0 %v698
        %730 = vmatpush1.xpose.msra.mxu0 %v696
        %731 = vmatprep.subr.mxu0 0.0
        %732 = vmatpush1.xpose.msra.mxu0 0.0
        %733 = vmatprep.subr.mxu0 0.0
        %734 = vmatpush1.xpose.msra.mxu0 0.0
        %735 = vmatprep.subr.mxu0 0.0
        %736 = vmatpush1.xpose.msra.mxu0 0.0
        %737 = vmatprep.subr.mxu0 0.0
        %738 = vmatpush1.xpose.msra.mxu0 0.0
        %739 = vmatprep.subr.mxu0 0.0
        %740 = vmatpush1.xpose.msra.mxu0 0.0
        %741 = vmatprep.subr.mxu0 0.0
        %742 = vmatpush1.xpose.msra.mxu0 0.0
        %743 = vmatprep.subr.mxu0 0.0
        %744 = vmatpush1.xpose.msra.mxu0 0.0
        %745 = vmatprep.subr.mxu0 0.0
        %746 = vmatpush1.xpose.msra.mxu0 0.0
        %747 = vmatprep.subr.mxu0 0.0
        %748 = vmatpush1.xpose.msra.mxu0 0.0
        %749 = vmatprep.subr.mxu0 0.0
        %750 = vmatpush1.xpose.msra.mxu0 0.0
        %751 = vmatprep.subr.mxu0 0.0
        %752 = vmatpush1.xpose.msra.mxu0 0.0
        %753 = vmatprep.subr.mxu0 0.0
        %754 = vmatpush1.xpose.msra.mxu0 0.0
        %755 = vmatprep.subr.mxu0 0.0
        %756 = vmatpush1.xpose.msra.mxu0 0.0
        %757 = vmatprep.subr.mxu0 0.0
        %758 = vmatpush1.xpose.msra.mxu0 0.0
        %759 = vmatprep.subr.mxu0 0.0
        %760 = vmatpush1.xpose.msra.mxu0 0.0
        %761 = vmatprep.subr.mxu0 0.0
        %762 = vmatpush1.xpose.msra.mxu0 0.0
        %763 = vmatprep.mubr.f32.mxu0 %v336
        %764 = vmatmul.mubr.f32.gmra.mrb[0].mxu0 %v335
        %v765 = vpop.f32.mrb[0].mxu0
        %v766 = vadd.f32 0.0, %v765
        %v767 = vpop.f32.mrb[0].mxu0
        %768 = vmatprep.mubr.f32.mxu0 %v338
        %769 = vmatmul.mubr.f32.gmra.mrb[0].mxu0 %v337
        %v770 = vpop.f32.mrb[0].mxu0
        %v771 = vadd.f32 0.0, %v770
        %v772 = vpop.f32.mrb[0].mxu0
        %773 = vmatprep.mubr.f32.mxu0 %v340
        %774 = vmatmul.mubr.f32.gmra.mrb[0].mxu0 %v339
        %v775 = vpop.f32.mrb[0].mxu0
        %v776 = vadd.f32 0.0, %v775
        %v777 = vpop.f32.mrb[0].mxu0
        %778 = vmatprep.mubr.f32.mxu0 %v342
        %779 = vmatmul.mubr.f32.gmra.mrb[0].mxu0 %v341
        %v780 = vpop.f32.mrb[0].mxu0
        %v781 = vadd.f32 0.0, %v780
        %v782 = vpop.f32.mrb[0].mxu0
        %783 = vmatprep.mubr.f32.mxu0 %v344
        %784 = vmatmul.mubr.f32.gmra.mrb[0].mxu0 %v343
        %v785 = vpop.f32.mrb[0].mxu0
        %v786 = vadd.f32 0.0, %v785
        %v787 = vpop.f32.mrb[0].mxu0
        %788 = vdwg.mxu0
        %v789 = vrcp.pop %v786
        %s790 = sld [smem:[#allocation2]]
        %v791 = vstv %s790
        %v792 = vmul.f32 %v791, %v789
        %v793 = vlaneseq
        %v794 = vshrl.u32 %v793, 7
        %v795 = vsub.s32 0, %v794
        %v796 = vrot.slane %v792, %v795
        %v797 = vmul.f32 %v766, %v796
        %v798 = vmul.f32 %v771, %v796
        %v799 = vmul.f32 %v776, %v796
        %v800 = vmul.f32 %v781, %v796
        %v801 = vld [vmem:[%s265] sm:$0xff]
        %v802 = vld [vmem:[%s265 + $0x8] sm:$0xff]
        %v803 = vld [vmem:[%s265 + $0x10] sm:$0xff]
        %v804 = vld [vmem:[%s265 + $0x18] sm:$0xff]
        %v805 = vadd.f32 %v797, %v801
        %v806 = vadd.f32 %v798, %v802
        %v807 = vadd.f32 %v799, %v803
        %v808 = vadd.f32 %v800, %v804
        %809 = vst [vmem:[%s301] sm:$0xff] %v805
        %810 = vst [vmem:[%s301 + $0x8] sm:$0xff] %v806
        %811 = vst [vmem:[%s301 + $0x10] sm:$0xff] %v807
        %812 = vst [vmem:[%s301 + $0x18] sm:$0xff] %v808
        %s813 = sand.u32 %s144, 1
        %s814 = scalar_lea.sflag [#allocation5], %s813
        %s815 = sand.u32 %s144, 1
        %s816 = smul.addr %s815, 32
        %s817 = scalar_lea.vmem [#allocation4], %s816
        // Predicated region
        $region75: #{tpu_custom_call.1} parent=69 // pred_check
          %p818 = pneg %p154
        $region76: #{tpu_custom_call.1} parent=69 // pred_check_branch
          %820 = sbr.rel (%p818) target = $region78
        $region77: #{tpu_custom_call.1} parent=69 // pred_region
          %s822 = ssub.s32 512, 512
          %823 = vsyncadd %s814, %s822
          %s824 = smul.addr %s23, 8
          %s825 = sadd.s32 %s24, %s824
          %s826 = smul.addr %s825, 128
          %s827 = scalar_lea.hbm %s4, %s826
          %s828 = sshll.u32 %s817, 4
          %s829 = int_to_ptr.vmem [resolvable:$true] %s828
          %834 = dma.vmem_to_hbm [thread:$0]  %s829, 512, %s827, %s814, 128, 256, 8
        $region78: #{tpu_custom_call.1} parent=69 // pred_fallthru
          _
      $region70: #{tpu_custom_call.1} parent=5 // pred_fallthru
        _
      %p835 = scmp.le.s32.totalorder 2, %s14
      // Predicated region
      $region79: #{tpu_custom_call.1} parent=5 // pred_check
        %p836 = pneg %p835
      $region80: #{tpu_custom_call.1} parent=5 // pred_check_branch
        %838 = sbr.rel (%p836) target = $region82
      $region81: #{tpu_custom_call.1} parent=5 // pred_region
        %s839 = ssub.s32 %s14, 2
        // Predicated region
        $region83: #{tpu_custom_call.1} parent=81 // pred_check
          %p840 = pneg %p160
        $region84: #{tpu_custom_call.1} parent=81 // pred_check_branch
          %842 = sbr.rel (%p840) target = $region86
        $region85: #{tpu_custom_call.1} parent=81 // pred_region
          %s843 = sand.u32 %s145, 1
          %s844 = scalar_lea.sflag [#allocation5], %s843
          %s845 = sand.u32 %s145, 1
          %s846 = smul.addr %s845, 32
          %s847 = scalar_lea.vmem [#allocation4], %s846
          %848 = dma.done %s844, 512
        $region86: #{tpu_custom_call.1} parent=81 // pred_fallthru
          _
      $region82: #{tpu_custom_call.1} parent=5 // pred_fallthru
        _
    $region6: #{tpu_custom_call.1} parent=1 // loop_footer
      %s18 = sadd.s32 1, %s14
    $region7: #{tpu_custom_call.1} parent=1 // loop_footer_branch
      %13 = sbr.rel target = $region3
    $region8: #{tpu_custom_call.1} parent=1 // loop_exit
      _
    %849 = vsyncpa [#allocation5], 1
    %s850 = scalar_lea.sflag [#allocation5], 1
    %851 = vsyncpa %s850, 1

</llo_original>
